<compile_context>
chip_gen: v7x
topology: tpu7x:2x2x1
jax: 0.10.0
libtpu: 0.0.40
codegen_flags: <defaults>
</compile_context>

<pallas_src>
import functools

import jax
import jax.numpy as jnp
from jax import lax
from jax.experimental import pallas as pl
from jax.experimental.pallas import tpu as pltpu


def _ceil_to(x, m):
    return -(-x // m) * m


def _pool_axis(x, axis, k, s):
    """Max-pool a jnp value along `axis` with window k, stride s (VALID)."""
    if k == 1 and s == 1:
        return x
    n = x.shape[axis]
    no = (n - k) // s + 1
    if k == s:
        # Non-overlapping windows: contiguous slice + reshape-split + reduce.
        idx = [slice(None)] * x.ndim
        idx[axis] = slice(0, no * k)
        xt = x[tuple(idx)]
        xt = xt.reshape(x.shape[:axis] + (no, k) + x.shape[axis + 1:])
        return jnp.max(xt, axis=axis + 1)

    # General (possibly overlapping) windows: running max over k slices.
    def window(d):
        idx = [slice(None)] * x.ndim
        idx[axis] = slice(d, d + (no - 1) * s + 1, s)
        return x[tuple(idx)]

    out = window(0)
    for d in range(1, k):
        out = jnp.maximum(out, window(d))
    return out


def _fused_maxpool3d_kernel(x_ref, o_ref, *, k1, s1, k2, s2):
    """One grid step: (nb, C, Hb, W) block -> (nb, C2, H2b, W1) block.

    Pool ordering (all axis-wise max pools commute, so this is exact):
      1. C  (k2,s2)  leading axis   -- cheapest, shrinks everything below
      2. H  (k1,s1)  sublane axis
      3. H1 (k2,s2)  sublane axis
      4. W  (k1,s1)  lane axis      -- most expensive relayout, done last on
                                       the smallest tensor
    """
    x = x_ref[...]                                    # (nb, C, Hb, W)
    nb, C = x.shape[0], x.shape[1]
    C2 = (C - k2) // s2 + 1

    if k2 == s2:
        # Non-overlapping C windows: leading-dims-only reshape (layout no-op),
        # then an elementwise max over a leading axis.
        y = x[:, :C2 * k2]
        y = y.reshape((nb * C2, k2) + x.shape[2:])
        y = jnp.max(y, axis=1)                        # (nb*C2, Hb, W)
    else:
        y = _pool_axis(x, 1, k2, s2)                  # (nb, C2, Hb, W)
        y = y.reshape((nb * C2,) + y.shape[2:])       # merge leading dims

    y = _pool_axis(y, 1, k1, s1)                      # H  stage-1 (sublanes)
    y = _pool_axis(y, 1, k2, s2)                      # H1 stage-2 (sublanes)
    y = _pool_axis(y, 2, k1, s1)                      # W  (lanes), smallest

    o_ref[...] = y.reshape((nb, C2) + y.shape[1:]).astype(o_ref.dtype)


def _plan(N, C, H, W, H2, k1, s1, k2, s2, itemsize):
    """Choose (#images per block, output-H rows per block).

    Budgeted on the PADDED VMEM footprint (~8 MiB input block) so that the
    double-buffered input + output blocks stay well under the scoped VMEM
    limit on every generation, including v7x's 64 MiB physical VMEM.
    """
    budget = 8 * 1024 * 1024
    sub = max(8, 32 // itemsize)                      # sublane tile rows
    w_pad = _ceil_to(W, 128)
    per_image = C * _ceil_to(H, sub) * w_pad * itemsize

    if per_image <= budget:
        nb = max(1, min(N, budget // per_image))      # whole images per step
        return nb, H2

    # One image per step; tile the composed H axis only when no composed H
    # window straddles a tile boundary (non-overlapping composed windows).
    composable = (k2 - 1) * s1 + k1 <= s1 * s2
    if not composable or H2 < 16:
        return 1, H2
    rows_per_out = s1 * s2                            # input rows per out row
    row_bytes = C * w_pad * itemsize
    max_rows = max(rows_per_out * 8, budget // max(1, row_bytes))
    th2 = (max_rows // rows_per_out) // 8 * 8         # multiple of 8 (8,128)
    th2 = max(8, min(th2, (H2 // 8) * 8))
    return 1, th2


def maxpool3d_r_forward(x, kernel_size1, kernel_size2, stride1, stride2):
    """Fused forward pass of maxpool3d_r. x: (N, C, H, W) -> (N, C2, H2, W1)."""
    k1, s1 = int(kernel_size1), int(stride1)
    k2, s2 = int(kernel_size2), int(stride2)
    N, C, H, W = x.shape
    H1 = (H - k1) // s1 + 1
    W1 = (W - k1) // s1 + 1
    H2 = (H1 - k2) // s2 + 1
    C2 = (C - k2) // s2 + 1
    assert min(H1, W1, H2, C2) > 0, "pooling window larger than input"

    itemsize = jnp.dtype(x.dtype).itemsize
    nb, th2 = _plan(N, C, H, W, H2, k1, s1, k2, s2, itemsize)
    n_nb = pl.cdiv(N, nb)
    n_hb = pl.cdiv(H2, th2)
    hb_in = H if n_hb == 1 else th2 * s1 * s2         # input rows per step

    in_block = (nb, C, hb_in, W)
    out_block = (nb, C2, th2, W1)

    sub = max(8, 32 // itemsize)
    in_bytes = nb * C * _ceil_to(hb_in, sub) * _ceil_to(W, 128) * itemsize
    out_bytes = nb * C2 * _ceil_to(th2, sub) * _ceil_to(W1, 128) * itemsize
    vmem_limit = int(min(64 * 1024 * 1024,
                         max(16 * 1024 * 1024, 4 * (in_bytes + out_bytes))))

    kernel = functools.partial(_fused_maxpool3d_kernel,
                               k1=k1, s1=s1, k2=k2, s2=s2)

    flops = (N * C2 * H * W * (k2 - 1) + N * C2 * H1 * W * (k1 - 1)
             + N * C2 * H2 * W * (k2 - 1) + N * C2 * H2 * W1 * (k1 - 1))
    bytes_accessed = (N * C * H * W + N * C2 * H2 * W1) * itemsize

    return pl.pallas_call(
        kernel,
        out_shape=jax.ShapeDtypeStruct((N, C2, H2, W1), x.dtype),
        grid=(n_nb, n_hb),
        in_specs=[pl.BlockSpec(in_block, lambda b, h: (b, 0, h, 0))],
        out_specs=pl.BlockSpec(out_block, lambda b, h: (b, 0, h, 0)),
        compiler_params=pltpu.CompilerParams(
            dimension_semantics=("parallel", "parallel"),
            vmem_limit_bytes=vmem_limit),
        cost_estimate=pl.CostEstimate(
            flops=flops, transcendentals=0, bytes_accessed=bytes_accessed),
    )(x)
    # TODO(synk): output lane density is W1 (inherited from NCHW); widening
    # lanes would need an extra HBM transpose pass, which costs more than it
    # saves for this purely memory-bound op.


def _ref_forward(x, k1, k2, s1, s2):
    """Plain-JAX reference matching the PyTorch module (for self-check)."""
    def mp(z, k, s):
        return lax.reduce_window(
            z, -jnp.inf, lax.max,
            window_dimensions=(1, 1, k, k),
            window_strides=(1, 1, s, s),
            padding="VALID")
    y = mp(x, k1, s1)
    y = jnp.transpose(y, (0, 3, 2, 1))   # torch transpose(1, 3)
    y = mp(y, k2, s2)
    y = jnp.transpose(y, (0, 3, 2, 1))
    return y


if __name__ == "__main__":
    # maxpool3d_r(kernel_size1=2, kernel_size2=2, stride1=2, stride2=2)
    k1, k2, s1, s2 = 2, 2, 2, 2
    N, C, H, W = 2, 4, 16, 16

    key = jax.random.PRNGKey(0)
    x = jax.random.normal(key, (N, C, H, W), dtype=jnp.float32)

    out = maxpool3d_r_forward(x, k1, k2, s1, s2)
    out = jax.block_until_ready(out)

    ref = _ref_forward(x, k1, k2, s1, s2)
    assert out.shape == ref.shape, (out.shape, ref.shape)
    assert jnp.allclose(out, ref), "Pallas output mismatch vs reference"

    print("KERNEL_OK")
</pallas_src>

<mosaic_0001>
module attributes {stable_mosaic.version = 11 : i64} {
  func.func @_fused_maxpool3d_kernel(%arg0: i32, %arg1: i32, %arg2: memref<2x4x16x16xf32, #tpu.memory_space<vmem>>, %arg3: memref<2x2x4x8xf32, #tpu.memory_space<vmem>>) attributes {dimension_semantics = [#tpu.dimension_semantics<parallel>, #tpu.dimension_semantics<parallel>], iteration_bounds = array<i64: 1, 1>, scalar_prefetch = 0 : i64, scratch_operands = 0 : i64, tpu.core_type = #tpu.core_type<tc>, window_params = [{transform_indices = @transform_0, window_bounds = array<i64: 2, 4, 16, 16>}, {transform_indices = @transform_1, window_bounds = array<i64: 2, 2, 4, 8>}]} {
    %c0 = arith.constant 0 : index
    %c0_0 = arith.constant 0 : index
    %c0_1 = arith.constant 0 : index
    %c0_2 = arith.constant 0 : index
    %0 = vector.load %arg2[%c0, %c0_0, %c0_1, %c0_2] : memref<2x4x16x16xf32, #tpu.memory_space<vmem>>, vector<2x4x16x16xf32>
    %1 = vector.shape_cast %0 : vector<2x4x16x16xf32> to vector<4x2x16x16xf32>
    %cst = arith.constant dense<0xFF800000> : vector<4x16x16xf32>
    %2 = vector.multi_reduction <maximumf>, %1, %cst [1] : vector<4x2x16x16xf32> to vector<4x16x16xf32>
    %3 = vector.shape_cast %2 : vector<4x16x16xf32> to vector<4x8x2x16xf32>
    %cst_3 = arith.constant dense<0xFF800000> : vector<4x8x16xf32>
    %4 = vector.multi_reduction <maximumf>, %3, %cst_3 [2] : vector<4x8x2x16xf32> to vector<4x8x16xf32>
    %5 = vector.shape_cast %4 : vector<4x8x16xf32> to vector<4x4x2x16xf32>
    %cst_4 = arith.constant dense<0xFF800000> : vector<4x4x16xf32>
    %6 = vector.multi_reduction <maximumf>, %5, %cst_4 [2] : vector<4x4x2x16xf32> to vector<4x4x16xf32>
    %7 = vector.shape_cast %6 : vector<4x4x16xf32> to vector<4x4x8x2xf32>
    %cst_5 = arith.constant dense<0xFF800000> : vector<4x4x8xf32>
    %8 = vector.multi_reduction <maximumf>, %7, %cst_5 [3] : vector<4x4x8x2xf32> to vector<4x4x8xf32>
    %9 = vector.shape_cast %8 : vector<4x4x8xf32> to vector<2x2x4x8xf32>
    %c0_6 = arith.constant 0 : index
    %c0_7 = arith.constant 0 : index
    %c0_8 = arith.constant 0 : index
    %c0_9 = arith.constant 0 : index
    %10 = vector.load %arg3[%c0_6, %c0_7, %c0_8, %c0_9] : memref<2x2x4x8xf32, #tpu.memory_space<vmem>>, vector<2x2x4x8xf32>
    tpu.vector_store %arg3[%c0_6, %c0_7, %c0_8, %c0_9], %9 {strides = array<i32>} : memref<2x2x4x8xf32, #tpu.memory_space<vmem>>, vector<2x2x4x8xf32>,
    return
  }
  func.func @transform_0(%arg0: i32, %arg1: i32) -> (i32, i32, i32, i32) {
    %c0_i32 = arith.constant 0 : i32
    %c0_i32_0 = arith.constant 0 : i32
    %c0_i32_1 = arith.constant 0 : i32
    return %arg0, %c0_i32, %arg1, %c0_i32_0 : i32, i32, i32, i32
  }
  func.func @transform_1(%arg0: i32, %arg1: i32) -> (i32, i32, i32, i32) {
    %c0_i32 = arith.constant 0 : i32
    %c0_i32_0 = arith.constant 0 : i32
    %c0_i32_1 = arith.constant 0 : i32
    return %arg0, %c0_i32, %arg1, %c0_i32_0 : i32, i32, i32, i32
  }
}

</mosaic_0001>

<llo_original>
// kernel: tpu_custom_call.1
$region0: #{tpu_custom_call.1}
  #allocation0 [shape = 'u32[]', space=smem, size = 0x4, offset = 0x4, fixed_abs, tag = 'smem constant byte address 0x4 - core index']
  #allocation1 [shape = 'u32[144,128]{1,0:T(1,128)}', space=vmem, size = 0x12000, scoped, tag = 'internal scratch']
  %s0 = inlined_call_operand.hbm [shape: f32[2,4,16,16], index: 0, kind: input, shape index: {}]
  %s1 = inlined_call_operand.hbm [shape: f32[2,2,4,8], index: 1, kind: output, shape index: {}]
  %s2 = sld [smem:[#allocation0]]
  $region18: #{tpu_custom_call.1} parent=0
    _
  %s4 = ssub.s32 1, %s2
  %s5 = scalar_select 0, %s4, %s2
  $region1: #{tpu_custom_call.1} parent=0
    #allocation2 [shape = 'u8[65536]{0}', space=vmem, size = 0x10000, scoped, tag = 'input window, operand 0, single buffered']
    #allocation3 [shape = 's32[1]{0}', space=sflag, size = 0x4, scoped, tag = 'scoped memory for tpu_custom_call.1']
    #allocation4 [shape = 's32[1]{0}', space=sflag, size = 0x4, scoped, tag = 'scoped memory for tpu_custom_call.1']
    #allocation5 [shape = 'u8[8192]{0}', space=vmem, size = 0x2000, scoped, tag = 'output window, operand 0, single buffered']
    %6 = vsyncpa [#allocation3], 0
    %7 = vsyncpa [#allocation4], 0
    // Predicated region
    $region2: #{tpu_custom_call.1} parent=1 // pred_check
      _
    $region3: #{tpu_custom_call.1} parent=1 // pred_check_branch
      %9 = sbr.rel (0) target = $region5
    $region4: #{tpu_custom_call.1} parent=1 // pred_region
      %s11 = ssub.s32 2048, 2048
      %12 = vsyncadd [#allocation3], %s11
      %s13 = sshll.u32 [#allocation2], 4
      %s14 = int_to_ptr.vmem [resolvable:$true] %s13
      %19 = dma.hbm_to_vmem [thread:$0]  %s0, 2048, %s14, [#allocation3], 128, 128, 8
    $region5: #{tpu_custom_call.1} parent=1 // pred_fallthru
      _
    // Predicated region
    $region6: #{tpu_custom_call.1} parent=1 // pred_check
      _
    $region7: #{tpu_custom_call.1} parent=1 // pred_check_branch
      %21 = sbr.rel (0) target = $region9
    $region8: #{tpu_custom_call.1} parent=1 // pred_region
      %22 = dma.done [#allocation3], 2048
    $region9: #{tpu_custom_call.1} parent=1 // pred_fallthru
      _
    %v23 = vld [vmem:[#allocation2] sm:$0xff]
    %v24 = vld [vmem:[#allocation2 + $0x8] sm:$0xff]
    %v25 = vld [vmem:[#allocation2 + $0x10] sm:$0xff]
    %v26 = vld [vmem:[#allocation2 + $0x18] sm:$0xff]
    %v27 = vld [vmem:[#allocation2 + $0x20] sm:$0xff]
    %v28 = vld [vmem:[#allocation2 + $0x28] sm:$0xff]
    %v29 = vld [vmem:[#allocation2 + $0x30] sm:$0xff]
    %v30 = vld [vmem:[#allocation2 + $0x38] sm:$0xff]
    %v31 = vld [vmem:[#allocation2 + $0x40] sm:$0xff]
    %v32 = vld [vmem:[#allocation2 + $0x48] sm:$0xff]
    %v33 = vld [vmem:[#allocation2 + $0x50] sm:$0xff]
    %v34 = vld [vmem:[#allocation2 + $0x58] sm:$0xff]
    %v35 = vld [vmem:[#allocation2 + $0x60] sm:$0xff]
    %v36 = vld [vmem:[#allocation2 + $0x68] sm:$0xff]
    %v37 = vld [vmem:[#allocation2 + $0x70] sm:$0xff]
    %v38 = vld [vmem:[#allocation2 + $0x78] sm:$0xff]
    %vm39 = vcmask 130048
    %v40 = vsel %vm39, %v23, -inf
    %v41 = vsel %vm39, %v25, -inf
    %v42 = vmax.f32 %v40, %v41
    %v43 = vsel %vm39, %v24, -inf
    %v44 = vsel %vm39, %v26, -inf
    %v45 = vmax.f32 %v43, %v44
    %v46 = vsel %vm39, %v27, -inf
    %v47 = vsel %vm39, %v29, -inf
    %v48 = vmax.f32 %v46, %v47
    %v49 = vsel %vm39, %v28, -inf
    %v50 = vsel %vm39, %v30, -inf
    %v51 = vmax.f32 %v49, %v50
    %v52 = vsel %vm39, %v31, -inf
    %v53 = vsel %vm39, %v33, -inf
    %v54 = vmax.f32 %v52, %v53
    %v55 = vsel %vm39, %v32, -inf
    %v56 = vsel %vm39, %v34, -inf
    %v57 = vmax.f32 %v55, %v56
    %v58 = vsel %vm39, %v35, -inf
    %v59 = vsel %vm39, %v37, -inf
    %v60 = vmax.f32 %v58, %v59
    %v61 = vsel %vm39, %v36, -inf
    %v62 = vsel %vm39, %v38, -inf
    %v63 = vmax.f32 %v61, %v62
    %v72 = vcombine.high %v42, %v42
    %v74 = vunpack.c.l.s4 1983009808
    %v75 = vunpack.c.0.s8 %v74
    %v76 = vlaneseq
    %v77 = vshrl.u32 %v76, 7
    %v78 = vsub.s32 %v75, %v77
    %v79 = vrot.slane %v42, %v78
    %v81 = vunpack.c.l.s4 1983009808
    %v82 = vunpack.c.0.s8 %v81
    %v83 = vlaneseq
    %v84 = vshrl.u32 %v83, 7
    %v85 = vsub.s32 %v82, %v84
    %v86 = vrot.slane %v72, %v85
    %v87 = vcombine.high %v79, %v79
    %v88 = vcombine.high %v86, %v86
    %v89 = vcombine.high %v45, %v45
    %v91 = vunpack.c.l.s4 1983009808
    %v92 = vunpack.c.0.s8 %v91
    %v93 = vlaneseq
    %v94 = vshrl.u32 %v93, 7
    %v95 = vsub.s32 %v92, %v94
    %v96 = vrot.slane %v45, %v95
    %v98 = vunpack.c.l.s4 1983009808
    %v99 = vunpack.c.0.s8 %v98
    %v100 = vlaneseq
    %v101 = vshrl.u32 %v100, 7
    %v102 = vsub.s32 %v99, %v101
    %v103 = vrot.slane %v89, %v102
    %v104 = vcombine.high %v96, %v96
    %v105 = vcombine.high %v103, %v103
    %v106 = vcombine.high %v48, %v48
    %v108 = vunpack.c.l.s4 1983009808
    %v109 = vunpack.c.0.s8 %v108
    %v110 = vlaneseq
    %v111 = vshrl.u32 %v110, 7
    %v112 = vsub.s32 %v109, %v111
    %v113 = vrot.slane %v48, %v112
    %v115 = vunpack.c.l.s4 1983009808
    %v116 = vunpack.c.0.s8 %v115
    %v117 = vlaneseq
    %v118 = vshrl.u32 %v117, 7
    %v119 = vsub.s32 %v116, %v118
    %v120 = vrot.slane %v106, %v119
    %v121 = vcombine.high %v113, %v113
    %v122 = vcombine.high %v120, %v120
    %v123 = vcombine.high %v51, %v51
    %v125 = vunpack.c.l.s4 1983009808
    %v126 = vunpack.c.0.s8 %v125
    %v127 = vlaneseq
    %v128 = vshrl.u32 %v127, 7
    %v129 = vsub.s32 %v126, %v128
    %v130 = vrot.slane %v51, %v129
    %v132 = vunpack.c.l.s4 1983009808
    %v133 = vunpack.c.0.s8 %v132
    %v134 = vlaneseq
    %v135 = vshrl.u32 %v134, 7
    %v136 = vsub.s32 %v133, %v135
    %v137 = vrot.slane %v123, %v136
    %v138 = vcombine.high %v130, %v130
    %v139 = vcombine.high %v137, %v137
    %v140 = vcombine.high %v54, %v54
    %v142 = vunpack.c.l.s4 1983009808
    %v143 = vunpack.c.0.s8 %v142
    %v144 = vlaneseq
    %v145 = vshrl.u32 %v144, 7
    %v146 = vsub.s32 %v143, %v145
    %v147 = vrot.slane %v54, %v146
    %v149 = vunpack.c.l.s4 1983009808
    %v150 = vunpack.c.0.s8 %v149
    %v151 = vlaneseq
    %v152 = vshrl.u32 %v151, 7
    %v153 = vsub.s32 %v150, %v152
    %v154 = vrot.slane %v140, %v153
    %v155 = vcombine.high %v147, %v147
    %v156 = vcombine.high %v154, %v154
    %v157 = vcombine.high %v57, %v57
    %v159 = vunpack.c.l.s4 1983009808
    %v160 = vunpack.c.0.s8 %v159
    %v161 = vlaneseq
    %v162 = vshrl.u32 %v161, 7
    %v163 = vsub.s32 %v160, %v162
    %v164 = vrot.slane %v57, %v163
    %v166 = vunpack.c.l.s4 1983009808
    %v167 = vunpack.c.0.s8 %v166
    %v168 = vlaneseq
    %v169 = vshrl.u32 %v168, 7
    %v170 = vsub.s32 %v167, %v169
    %v171 = vrot.slane %v157, %v170
    %v172 = vcombine.high %v164, %v164
    %v173 = vcombine.high %v171, %v171
    %v174 = vcombine.high %v60, %v60
    %v176 = vunpack.c.l.s4 1983009808
    %v177 = vunpack.c.0.s8 %v176
    %v178 = vlaneseq
    %v179 = vshrl.u32 %v178, 7
    %v180 = vsub.s32 %v177, %v179
    %v181 = vrot.slane %v60, %v180
    %v183 = vunpack.c.l.s4 1983009808
    %v184 = vunpack.c.0.s8 %v183
    %v185 = vlaneseq
    %v186 = vshrl.u32 %v185, 7
    %v187 = vsub.s32 %v184, %v186
    %v188 = vrot.slane %v174, %v187
    %v189 = vcombine.high %v181, %v181
    %v190 = vcombine.high %v188, %v188
    %v191 = vcombine.high %v63, %v63
    %v193 = vunpack.c.l.s4 1983009808
    %v194 = vunpack.c.0.s8 %v193
    %v195 = vlaneseq
    %v196 = vshrl.u32 %v195, 7
    %v197 = vsub.s32 %v194, %v196
    %v198 = vrot.slane %v63, %v197
    %v200 = vunpack.c.l.s4 1983009808
    %v201 = vunpack.c.0.s8 %v200
    %v202 = vlaneseq
    %v203 = vshrl.u32 %v202, 7
    %v204 = vsub.s32 %v201, %v203
    %v205 = vrot.slane %v191, %v204
    %v206 = vcombine.high %v198, %v198
    %v207 = vcombine.high %v205, %v205
    %vm240 = vcmask 123904
    %v241 = vsel %vm240, %v79, -inf
    %v242 = vrot.slane %v241, 4
    %v243 = vmax.f32 %v241, %v242
    %v244 = vrot.slane %v243, 2
    %v245 = vmax.f32 %v243, %v244
    %v246 = vrot.slane %v245, 1
    %v247 = vmax.f32 %v245, %v246
    %v248 = vsel %vm240, %v87, -inf
    %v249 = vrot.slane %v248, 4
    %v250 = vmax.f32 %v248, %v249
    %v251 = vrot.slane %v250, 2
    %v252 = vmax.f32 %v250, %v251
    %v253 = vrot.slane %v252, 1
    %v254 = vmax.f32 %v252, %v253
    %v255 = vsel %vm240, %v86, -inf
    %v256 = vrot.slane %v255, 4
    %v257 = vmax.f32 %v255, %v256
    %v258 = vrot.slane %v257, 2
    %v259 = vmax.f32 %v257, %v258
    %v260 = vrot.slane %v259, 1
    %v261 = vmax.f32 %v259, %v260
    %v262 = vsel %vm240, %v88, -inf
    %v263 = vrot.slane %v262, 4
    %v264 = vmax.f32 %v262, %v263
    %v265 = vrot.slane %v264, 2
    %v266 = vmax.f32 %v264, %v265
    %v267 = vrot.slane %v266, 1
    %v268 = vmax.f32 %v266, %v267
    %v269 = vsel %vm240, %v96, -inf
    %v270 = vrot.slane %v269, 4
    %v271 = vmax.f32 %v269, %v270
    %v272 = vrot.slane %v271, 2
    %v273 = vmax.f32 %v271, %v272
    %v274 = vrot.slane %v273, 1
    %v275 = vmax.f32 %v273, %v274
    %v276 = vsel %vm240, %v104, -inf
    %v277 = vrot.slane %v276, 4
    %v278 = vmax.f32 %v276, %v277
    %v279 = vrot.slane %v278, 2
    %v280 = vmax.f32 %v278, %v279
    %v281 = vrot.slane %v280, 1
    %v282 = vmax.f32 %v280, %v281
    %v283 = vsel %vm240, %v103, -inf
    %v284 = vrot.slane %v283, 4
    %v285 = vmax.f32 %v283, %v284
    %v286 = vrot.slane %v285, 2
    %v287 = vmax.f32 %v285, %v286
    %v288 = vrot.slane %v287, 1
    %v289 = vmax.f32 %v287, %v288
    %v290 = vsel %vm240, %v105, -inf
    %v291 = vrot.slane %v290, 4
    %v292 = vmax.f32 %v290, %v291
    %v293 = vrot.slane %v292, 2
    %v294 = vmax.f32 %v292, %v293
    %v295 = vrot.slane %v294, 1
    %v296 = vmax.f32 %v294, %v295
    %v297 = vsel %vm240, %v113, -inf
    %v298 = vrot.slane %v297, 4
    %v299 = vmax.f32 %v297, %v298
    %v300 = vrot.slane %v299, 2
    %v301 = vmax.f32 %v299, %v300
    %v302 = vrot.slane %v301, 1
    %v303 = vmax.f32 %v301, %v302
    %v304 = vsel %vm240, %v121, -inf
    %v305 = vrot.slane %v304, 4
    %v306 = vmax.f32 %v304, %v305
    %v307 = vrot.slane %v306, 2
    %v308 = vmax.f32 %v306, %v307
    %v309 = vrot.slane %v308, 1
    %v310 = vmax.f32 %v308, %v309
    %v311 = vsel %vm240, %v120, -inf
    %v312 = vrot.slane %v311, 4
    %v313 = vmax.f32 %v311, %v312
    %v314 = vrot.slane %v313, 2
    %v315 = vmax.f32 %v313, %v314
    %v316 = vrot.slane %v315, 1
    %v317 = vmax.f32 %v315, %v316
    %v318 = vsel %vm240, %v122, -inf
    %v319 = vrot.slane %v318, 4
    %v320 = vmax.f32 %v318, %v319
    %v321 = vrot.slane %v320, 2
    %v322 = vmax.f32 %v320, %v321
    %v323 = vrot.slane %v322, 1
    %v324 = vmax.f32 %v322, %v323
    %v325 = vsel %vm240, %v130, -inf
    %v326 = vrot.slane %v325, 4
    %v327 = vmax.f32 %v325, %v326
    %v328 = vrot.slane %v327, 2
    %v329 = vmax.f32 %v327, %v328
    %v330 = vrot.slane %v329, 1
    %v331 = vmax.f32 %v329, %v330
    %v332 = vsel %vm240, %v138, -inf
    %v333 = vrot.slane %v332, 4
    %v334 = vmax.f32 %v332, %v333
    %v335 = vrot.slane %v334, 2
    %v336 = vmax.f32 %v334, %v335
    %v337 = vrot.slane %v336, 1
    %v338 = vmax.f32 %v336, %v337
    %v339 = vsel %vm240, %v137, -inf
    %v340 = vrot.slane %v339, 4
    %v341 = vmax.f32 %v339, %v340
    %v342 = vrot.slane %v341, 2
    %v343 = vmax.f32 %v341, %v342
    %v344 = vrot.slane %v343, 1
    %v345 = vmax.f32 %v343, %v344
    %v346 = vsel %vm240, %v139, -inf
    %v347 = vrot.slane %v346, 4
    %v348 = vmax.f32 %v346, %v347
    %v349 = vrot.slane %v348, 2
    %v350 = vmax.f32 %v348, %v349
    %v351 = vrot.slane %v350, 1
    %v352 = vmax.f32 %v350, %v351
    %v353 = vsel %vm240, %v147, -inf
    %v354 = vrot.slane %v353, 4
    %v355 = vmax.f32 %v353, %v354
    %v356 = vrot.slane %v355, 2
    %v357 = vmax.f32 %v355, %v356
    %v358 = vrot.slane %v357, 1
    %v359 = vmax.f32 %v357, %v358
    %v360 = vsel %vm240, %v155, -inf
    %v361 = vrot.slane %v360, 4
    %v362 = vmax.f32 %v360, %v361
    %v363 = vrot.slane %v362, 2
    %v364 = vmax.f32 %v362, %v363
    %v365 = vrot.slane %v364, 1
    %v366 = vmax.f32 %v364, %v365
    %v367 = vsel %vm240, %v154, -inf
    %v368 = vrot.slane %v367, 4
    %v369 = vmax.f32 %v367, %v368
    %v370 = vrot.slane %v369, 2
    %v371 = vmax.f32 %v369, %v370
    %v372 = vrot.slane %v371, 1
    %v373 = vmax.f32 %v371, %v372
    %v374 = vsel %vm240, %v156, -inf
    %v375 = vrot.slane %v374, 4
    %v376 = vmax.f32 %v374, %v375
    %v377 = vrot.slane %v376, 2
    %v378 = vmax.f32 %v376, %v377
    %v379 = vrot.slane %v378, 1
    %v380 = vmax.f32 %v378, %v379
    %v381 = vsel %vm240, %v164, -inf
    %v382 = vrot.slane %v381, 4
    %v383 = vmax.f32 %v381, %v382
    %v384 = vrot.slane %v383, 2
    %v385 = vmax.f32 %v383, %v384
    %v386 = vrot.slane %v385, 1
    %v387 = vmax.f32 %v385, %v386
    %v388 = vsel %vm240, %v172, -inf
    %v389 = vrot.slane %v388, 4
    %v390 = vmax.f32 %v388, %v389
    %v391 = vrot.slane %v390, 2
    %v392 = vmax.f32 %v390, %v391
    %v393 = vrot.slane %v392, 1
    %v394 = vmax.f32 %v392, %v393
    %v395 = vsel %vm240, %v171, -inf
    %v396 = vrot.slane %v395, 4
    %v397 = vmax.f32 %v395, %v396
    %v398 = vrot.slane %v397, 2
    %v399 = vmax.f32 %v397, %v398
    %v400 = vrot.slane %v399, 1
    %v401 = vmax.f32 %v399, %v400
    %v402 = vsel %vm240, %v173, -inf
    %v403 = vrot.slane %v402, 4
    %v404 = vmax.f32 %v402, %v403
    %v405 = vrot.slane %v404, 2
    %v406 = vmax.f32 %v404, %v405
    %v407 = vrot.slane %v406, 1
    %v408 = vmax.f32 %v406, %v407
    %v409 = vsel %vm240, %v181, -inf
    %v410 = vrot.slane %v409, 4
    %v411 = vmax.f32 %v409, %v410
    %v412 = vrot.slane %v411, 2
    %v413 = vmax.f32 %v411, %v412
    %v414 = vrot.slane %v413, 1
    %v415 = vmax.f32 %v413, %v414
    %v416 = vsel %vm240, %v189, -inf
    %v417 = vrot.slane %v416, 4
    %v418 = vmax.f32 %v416, %v417
    %v419 = vrot.slane %v418, 2
    %v420 = vmax.f32 %v418, %v419
    %v421 = vrot.slane %v420, 1
    %v422 = vmax.f32 %v420, %v421
    %v423 = vsel %vm240, %v188, -inf
    %v424 = vrot.slane %v423, 4
    %v425 = vmax.f32 %v423, %v424
    %v426 = vrot.slane %v425, 2
    %v427 = vmax.f32 %v425, %v426
    %v428 = vrot.slane %v427, 1
    %v429 = vmax.f32 %v427, %v428
    %v430 = vsel %vm240, %v190, -inf
    %v431 = vrot.slane %v430, 4
    %v432 = vmax.f32 %v430, %v431
    %v433 = vrot.slane %v432, 2
    %v434 = vmax.f32 %v432, %v433
    %v435 = vrot.slane %v434, 1
    %v436 = vmax.f32 %v434, %v435
    %v437 = vsel %vm240, %v198, -inf
    %v438 = vrot.slane %v437, 4
    %v439 = vmax.f32 %v437, %v438
    %v440 = vrot.slane %v439, 2
    %v441 = vmax.f32 %v439, %v440
    %v442 = vrot.slane %v441, 1
    %v443 = vmax.f32 %v441, %v442
    %v444 = vsel %vm240, %v206, -inf
    %v445 = vrot.slane %v444, 4
    %v446 = vmax.f32 %v444, %v445
    %v447 = vrot.slane %v446, 2
    %v448 = vmax.f32 %v446, %v447
    %v449 = vrot.slane %v448, 1
    %v450 = vmax.f32 %v448, %v449
    %v451 = vsel %vm240, %v205, -inf
    %v452 = vrot.slane %v451, 4
    %v453 = vmax.f32 %v451, %v452
    %v454 = vrot.slane %v453, 2
    %v455 = vmax.f32 %v453, %v454
    %v456 = vrot.slane %v455, 1
    %v457 = vmax.f32 %v455, %v456
    %v458 = vsel %vm240, %v207, -inf
    %v459 = vrot.slane %v458, 4
    %v460 = vmax.f32 %v458, %v459
    %v461 = vrot.slane %v460, 2
    %v462 = vmax.f32 %v460, %v461
    %v463 = vrot.slane %v462, 1
    %v464 = vmax.f32 %v462, %v463
    %v465 = vsel %vm39, %v247, -inf
    %v466 = vsel %vm39, %v254, -inf
    %v467 = vmax.f32 %v465, %v466
    %v468 = vsel %vm39, %v261, -inf
    %v469 = vsel %vm39, %v268, -inf
    %v470 = vmax.f32 %v468, %v469
    %v471 = vsel %vm39, %v275, -inf
    %v472 = vsel %vm39, %v282, -inf
    %v473 = vmax.f32 %v471, %v472
    %v474 = vsel %vm39, %v289, -inf
    %v475 = vsel %vm39, %v296, -inf
    %v476 = vmax.f32 %v474, %v475
    %v477 = vsel %vm39, %v303, -inf
    %v478 = vsel %vm39, %v310, -inf
    %v479 = vmax.f32 %v477, %v478
    %v480 = vsel %vm39, %v317, -inf
    %v481 = vsel %vm39, %v324, -inf
    %v482 = vmax.f32 %v480, %v481
    %v483 = vsel %vm39, %v331, -inf
    %v484 = vsel %vm39, %v338, -inf
    %v485 = vmax.f32 %v483, %v484
    %v486 = vsel %vm39, %v345, -inf
    %v487 = vsel %vm39, %v352, -inf
    %v488 = vmax.f32 %v486, %v487
    %v489 = vsel %vm39, %v359, -inf
    %v490 = vsel %vm39, %v366, -inf
    %v491 = vmax.f32 %v489, %v490
    %v492 = vsel %vm39, %v373, -inf
    %v493 = vsel %vm39, %v380, -inf
    %v494 = vmax.f32 %v492, %v493
    %v495 = vsel %vm39, %v387, -inf
    %v496 = vsel %vm39, %v394, -inf
    %v497 = vmax.f32 %v495, %v496
    %v498 = vsel %vm39, %v401, -inf
    %v499 = vsel %vm39, %v408, -inf
    %v500 = vmax.f32 %v498, %v499
    %v501 = vsel %vm39, %v415, -inf
    %v502 = vsel %vm39, %v422, -inf
    %v503 = vmax.f32 %v501, %v502
    %v504 = vsel %vm39, %v429, -inf
    %v505 = vsel %vm39, %v436, -inf
    %v506 = vmax.f32 %v504, %v505
    %v507 = vsel %vm39, %v443, -inf
    %v508 = vsel %vm39, %v450, -inf
    %v509 = vmax.f32 %v507, %v508
    %v510 = vsel %vm39, %v457, -inf
    %v511 = vsel %vm39, %v464, -inf
    %v512 = vmax.f32 %v510, %v511
    %529 = vrot.lane.b32.xlu0 %v467, 126
    %v530 = vpop.permute.xlu0 %529
    %531 = vrot.lane.b32.xlu0 %v470, 126
    %v532 = vpop.permute.xlu0 %531
    %533 = vrot.lane.b32.xlu0 %v473, 126
    %v534 = vpop.permute.xlu0 %533
    %535 = vrot.lane.b32.xlu0 %v476, 126
    %v536 = vpop.permute.xlu0 %535
    %537 = vrot.lane.b32.xlu0 %v479, 126
    %v538 = vpop.permute.xlu0 %537
    %539 = vrot.lane.b32.xlu0 %v482, 126
    %v540 = vpop.permute.xlu0 %539
    %541 = vrot.lane.b32.xlu0 %v485, 126
    %v542 = vpop.permute.xlu0 %541
    %543 = vrot.lane.b32.xlu0 %v488, 126
    %v544 = vpop.permute.xlu0 %543
    %545 = vrot.lane.b32.xlu0 %v491, 126
    %v546 = vpop.permute.xlu0 %545
    %547 = vrot.lane.b32.xlu0 %v494, 126
    %v548 = vpop.permute.xlu0 %547
    %549 = vrot.lane.b32.xlu0 %v497, 126
    %v550 = vpop.permute.xlu0 %549
    %551 = vrot.lane.b32.xlu0 %v500, 126
    %v552 = vpop.permute.xlu0 %551
    %553 = vrot.lane.b32.xlu0 %v503, 126
    %v554 = vpop.permute.xlu0 %553
    %555 = vrot.lane.b32.xlu0 %v506, 126
    %v556 = vpop.permute.xlu0 %555
    %557 = vrot.lane.b32.xlu0 %v509, 126
    %v558 = vpop.permute.xlu0 %557
    %559 = vrot.lane.b32.xlu0 %v512, 126
    %v560 = vpop.permute.xlu0 %559
    %561 = vrot.lane.b32.xlu0 %v467, 124
    %v562 = vpop.permute.xlu0 %561
    %563 = vrot.lane.b32.xlu0 %v470, 124
    %v564 = vpop.permute.xlu0 %563
    %565 = vrot.lane.b32.xlu0 %v473, 124
    %v566 = vpop.permute.xlu0 %565
    %567 = vrot.lane.b32.xlu0 %v476, 124
    %v568 = vpop.permute.xlu0 %567
    %569 = vrot.lane.b32.xlu0 %v479, 124
    %v570 = vpop.permute.xlu0 %569
    %571 = vrot.lane.b32.xlu0 %v482, 124
    %v572 = vpop.permute.xlu0 %571
    %573 = vrot.lane.b32.xlu0 %v485, 124
    %v574 = vpop.permute.xlu0 %573
    %575 = vrot.lane.b32.xlu0 %v488, 124
    %v576 = vpop.permute.xlu0 %575
    %577 = vrot.lane.b32.xlu0 %v491, 124
    %v578 = vpop.permute.xlu0 %577
    %579 = vrot.lane.b32.xlu0 %v494, 124
    %v580 = vpop.permute.xlu0 %579
    %581 = vrot.lane.b32.xlu0 %v497, 124
    %v582 = vpop.permute.xlu0 %581
    %583 = vrot.lane.b32.xlu0 %v500, 124
    %v584 = vpop.permute.xlu0 %583
    %585 = vrot.lane.b32.xlu0 %v503, 124
    %v586 = vpop.permute.xlu0 %585
    %587 = vrot.lane.b32.xlu0 %v506, 124
    %v588 = vpop.permute.xlu0 %587
    %589 = vrot.lane.b32.xlu0 %v509, 124
    %v590 = vpop.permute.xlu0 %589
    %591 = vrot.lane.b32.xlu0 %v512, 124
    %v592 = vpop.permute.xlu0 %591
    %593 = vrot.lane.b32.xlu0 %v467, 122
    %v594 = vpop.permute.xlu0 %593
    %595 = vrot.lane.b32.xlu0 %v470, 122
    %v596 = vpop.permute.xlu0 %595
    %597 = vrot.lane.b32.xlu0 %v473, 122
    %v598 = vpop.permute.xlu0 %597
    %599 = vrot.lane.b32.xlu0 %v476, 122
    %v600 = vpop.permute.xlu0 %599
    %601 = vrot.lane.b32.xlu0 %v479, 122
    %v602 = vpop.permute.xlu0 %601
    %603 = vrot.lane.b32.xlu0 %v482, 122
    %v604 = vpop.permute.xlu0 %603
    %605 = vrot.lane.b32.xlu0 %v485, 122
    %v606 = vpop.permute.xlu0 %605
    %607 = vrot.lane.b32.xlu0 %v488, 122
    %v608 = vpop.permute.xlu0 %607
    %609 = vrot.lane.b32.xlu0 %v491, 122
    %v610 = vpop.permute.xlu0 %609
    %611 = vrot.lane.b32.xlu0 %v494, 122
    %v612 = vpop.permute.xlu0 %611
    %613 = vrot.lane.b32.xlu0 %v497, 122
    %v614 = vpop.permute.xlu0 %613
    %615 = vrot.lane.b32.xlu0 %v500, 122
    %v616 = vpop.permute.xlu0 %615
    %617 = vrot.lane.b32.xlu0 %v503, 122
    %v618 = vpop.permute.xlu0 %617
    %619 = vrot.lane.b32.xlu0 %v506, 122
    %v620 = vpop.permute.xlu0 %619
    %621 = vrot.lane.b32.xlu0 %v509, 122
    %v622 = vpop.permute.xlu0 %621
    %623 = vrot.lane.b32.xlu0 %v512, 122
    %v624 = vpop.permute.xlu0 %623
    %625 = vrot.lane.b32.xlu0 %v467, 120
    %v626 = vpop.permute.xlu0 %625
    %627 = vrot.lane.b32.xlu0 %v470, 120
    %v628 = vpop.permute.xlu0 %627
    %629 = vrot.lane.b32.xlu0 %v473, 120
    %v630 = vpop.permute.xlu0 %629
    %631 = vrot.lane.b32.xlu0 %v476, 120
    %v632 = vpop.permute.xlu0 %631
    %633 = vrot.lane.b32.xlu0 %v479, 120
    %v634 = vpop.permute.xlu0 %633
    %635 = vrot.lane.b32.xlu0 %v482, 120
    %v636 = vpop.permute.xlu0 %635
    %637 = vrot.lane.b32.xlu0 %v485, 120
    %v638 = vpop.permute.xlu0 %637
    %639 = vrot.lane.b32.xlu0 %v488, 120
    %v640 = vpop.permute.xlu0 %639
    %641 = vrot.lane.b32.xlu0 %v491, 120
    %v642 = vpop.permute.xlu0 %641
    %643 = vrot.lane.b32.xlu0 %v494, 120
    %v644 = vpop.permute.xlu0 %643
    %645 = vrot.lane.b32.xlu0 %v497, 120
    %v646 = vpop.permute.xlu0 %645
    %647 = vrot.lane.b32.xlu0 %v500, 120
    %v648 = vpop.permute.xlu0 %647
    %649 = vrot.lane.b32.xlu0 %v503, 120
    %v650 = vpop.permute.xlu0 %649
    %651 = vrot.lane.b32.xlu0 %v506, 120
    %v652 = vpop.permute.xlu0 %651
    %653 = vrot.lane.b32.xlu0 %v509, 120
    %v654 = vpop.permute.xlu0 %653
    %655 = vrot.lane.b32.xlu0 %v512, 120
    %v656 = vpop.permute.xlu0 %655
    %657 = vrot.lane.b32.xlu0 %v467, 118
    %v658 = vpop.permute.xlu0 %657
    %659 = vrot.lane.b32.xlu0 %v470, 118
    %v660 = vpop.permute.xlu0 %659
    %661 = vrot.lane.b32.xlu0 %v473, 118
    %v662 = vpop.permute.xlu0 %661
    %663 = vrot.lane.b32.xlu0 %v476, 118
    %v664 = vpop.permute.xlu0 %663
    %665 = vrot.lane.b32.xlu0 %v479, 118
    %v666 = vpop.permute.xlu0 %665
    %667 = vrot.lane.b32.xlu0 %v482, 118
    %v668 = vpop.permute.xlu0 %667
    %669 = vrot.lane.b32.xlu0 %v485, 118
    %v670 = vpop.permute.xlu0 %669
    %671 = vrot.lane.b32.xlu0 %v488, 118
    %v672 = vpop.permute.xlu0 %671
    %673 = vrot.lane.b32.xlu0 %v491, 118
    %v674 = vpop.permute.xlu0 %673
    %675 = vrot.lane.b32.xlu0 %v494, 118
    %v676 = vpop.permute.xlu0 %675
    %677 = vrot.lane.b32.xlu0 %v497, 118
    %v678 = vpop.permute.xlu0 %677
    %679 = vrot.lane.b32.xlu0 %v500, 118
    %v680 = vpop.permute.xlu0 %679
    %681 = vrot.lane.b32.xlu0 %v503, 118
    %v682 = vpop.permute.xlu0 %681
    %683 = vrot.lane.b32.xlu0 %v506, 118
    %v684 = vpop.permute.xlu0 %683
    %685 = vrot.lane.b32.xlu0 %v509, 118
    %v686 = vpop.permute.xlu0 %685
    %687 = vrot.lane.b32.xlu0 %v512, 118
    %v688 = vpop.permute.xlu0 %687
    %689 = vrot.lane.b32.xlu0 %v467, 116
    %v690 = vpop.permute.xlu0 %689
    %691 = vrot.lane.b32.xlu0 %v470, 116
    %v692 = vpop.permute.xlu0 %691
    %693 = vrot.lane.b32.xlu0 %v473, 116
    %v694 = vpop.permute.xlu0 %693
    %695 = vrot.lane.b32.xlu0 %v476, 116
    %v696 = vpop.permute.xlu0 %695
    %697 = vrot.lane.b32.xlu0 %v479, 116
    %v698 = vpop.permute.xlu0 %697
    %699 = vrot.lane.b32.xlu0 %v482, 116
    %v700 = vpop.permute.xlu0 %699
    %701 = vrot.lane.b32.xlu0 %v485, 116
    %v702 = vpop.permute.xlu0 %701
    %703 = vrot.lane.b32.xlu0 %v488, 116
    %v704 = vpop.permute.xlu0 %703
    %705 = vrot.lane.b32.xlu0 %v491, 116
    %v706 = vpop.permute.xlu0 %705
    %707 = vrot.lane.b32.xlu0 %v494, 116
    %v708 = vpop.permute.xlu0 %707
    %709 = vrot.lane.b32.xlu0 %v497, 116
    %v710 = vpop.permute.xlu0 %709
    %711 = vrot.lane.b32.xlu0 %v500, 116
    %v712 = vpop.permute.xlu0 %711
    %713 = vrot.lane.b32.xlu0 %v503, 116
    %v714 = vpop.permute.xlu0 %713
    %715 = vrot.lane.b32.xlu0 %v506, 116
    %v716 = vpop.permute.xlu0 %715
    %717 = vrot.lane.b32.xlu0 %v509, 116
    %v718 = vpop.permute.xlu0 %717
    %719 = vrot.lane.b32.xlu0 %v512, 116
    %v720 = vpop.permute.xlu0 %719
    %721 = vrot.lane.b32.xlu0 %v467, 114
    %v722 = vpop.permute.xlu0 %721
    %723 = vrot.lane.b32.xlu0 %v470, 114
    %v724 = vpop.permute.xlu0 %723
    %725 = vrot.lane.b32.xlu0 %v473, 114
    %v726 = vpop.permute.xlu0 %725
    %727 = vrot.lane.b32.xlu0 %v476, 114
    %v728 = vpop.permute.xlu0 %727
    %729 = vrot.lane.b32.xlu0 %v479, 114
    %v730 = vpop.permute.xlu0 %729
    %731 = vrot.lane.b32.xlu0 %v482, 114
    %v732 = vpop.permute.xlu0 %731
    %733 = vrot.lane.b32.xlu0 %v485, 114
    %v734 = vpop.permute.xlu0 %733
    %735 = vrot.lane.b32.xlu0 %v488, 114
    %v736 = vpop.permute.xlu0 %735
    %737 = vrot.lane.b32.xlu0 %v491, 114
    %v738 = vpop.permute.xlu0 %737
    %739 = vrot.lane.b32.xlu0 %v494, 114
    %v740 = vpop.permute.xlu0 %739
    %741 = vrot.lane.b32.xlu0 %v497, 114
    %v742 = vpop.permute.xlu0 %741
    %743 = vrot.lane.b32.xlu0 %v500, 114
    %v744 = vpop.permute.xlu0 %743
    %745 = vrot.lane.b32.xlu0 %v503, 114
    %v746 = vpop.permute.xlu0 %745
    %747 = vrot.lane.b32.xlu0 %v506, 114
    %v748 = vpop.permute.xlu0 %747
    %749 = vrot.lane.b32.xlu0 %v509, 114
    %v750 = vpop.permute.xlu0 %749
    %751 = vrot.lane.b32.xlu0 %v512, 114
    %v752 = vpop.permute.xlu0 %751
    %v753 = vrot.slane %v470, 7
    %vm754 = vcmask 1041409
    %v755 = vsel %vm754, %v753, %v467
    %v756 = vrot.slane %v473, 6
    %vm757 = vcmask 1042434
    %v758 = vsel %vm757, %v756, %v755
    %v759 = vrot.slane %v476, 5
    %vm760 = vcmask 1043459
    %v761 = vsel %vm760, %v759, %v758
    %v762 = vrot.slane %v532, 7
    %v763 = vsel %vm754, %v762, %v530
    %v764 = vrot.slane %v534, 6
    %v765 = vsel %vm757, %v764, %v763
    %v766 = vrot.slane %v536, 5
    %v767 = vsel %vm760, %v766, %v765
    %v768 = vrot.slane %v564, 7
    %v769 = vsel %vm754, %v768, %v562
    %v770 = vrot.slane %v566, 6
    %v771 = vsel %vm757, %v770, %v769
    %v772 = vrot.slane %v568, 5
    %v773 = vsel %vm760, %v772, %v771
    %v774 = vrot.slane %v596, 7
    %v775 = vsel %vm754, %v774, %v594
    %v776 = vrot.slane %v598, 6
    %v777 = vsel %vm757, %v776, %v775
    %v778 = vrot.slane %v600, 5
    %v779 = vsel %vm760, %v778, %v777
    %v780 = vrot.slane %v628, 7
    %v781 = vsel %vm754, %v780, %v626
    %v782 = vrot.slane %v630, 6
    %v783 = vsel %vm757, %v782, %v781
    %v784 = vrot.slane %v632, 5
    %v785 = vsel %vm760, %v784, %v783
    %v786 = vrot.slane %v660, 7
    %v787 = vsel %vm754, %v786, %v658
    %v788 = vrot.slane %v662, 6
    %v789 = vsel %vm757, %v788, %v787
    %v790 = vrot.slane %v664, 5
    %v791 = vsel %vm760, %v790, %v789
    %v792 = vrot.slane %v692, 7
    %v793 = vsel %vm754, %v792, %v690
    %v794 = vrot.slane %v694, 6
    %v795 = vsel %vm757, %v794, %v793
    %v796 = vrot.slane %v696, 5
    %v797 = vsel %vm760, %v796, %v795
    %v798 = vrot.slane %v724, 7
    %v799 = vsel %vm754, %v798, %v722
    %v800 = vrot.slane %v726, 6
    %v801 = vsel %vm757, %v800, %v799
    %v802 = vrot.slane %v728, 5
    %v803 = vsel %vm760, %v802, %v801
    %v804 = vrot.slane %v482, 7
    %v805 = vsel %vm754, %v804, %v479
    %v806 = vrot.slane %v485, 6
    %v807 = vsel %vm757, %v806, %v805
    %v808 = vrot.slane %v488, 5
    %v809 = vsel %vm760, %v808, %v807
    %v810 = vrot.slane %v540, 7
    %v811 = vsel %vm754, %v810, %v538
    %v812 = vrot.slane %v542, 6
    %v813 = vsel %vm757, %v812, %v811
    %v814 = vrot.slane %v544, 5
    %v815 = vsel %vm760, %v814, %v813
    %v816 = vrot.slane %v572, 7
    %v817 = vsel %vm754, %v816, %v570
    %v818 = vrot.slane %v574, 6
    %v819 = vsel %vm757, %v818, %v817
    %v820 = vrot.slane %v576, 5
    %v821 = vsel %vm760, %v820, %v819
    %v822 = vrot.slane %v604, 7
    %v823 = vsel %vm754, %v822, %v602
    %v824 = vrot.slane %v606, 6
    %v825 = vsel %vm757, %v824, %v823
    %v826 = vrot.slane %v608, 5
    %v827 = vsel %vm760, %v826, %v825
    %v828 = vrot.slane %v636, 7
    %v829 = vsel %vm754, %v828, %v634
    %v830 = vrot.slane %v638, 6
    %v831 = vsel %vm757, %v830, %v829
    %v832 = vrot.slane %v640, 5
    %v833 = vsel %vm760, %v832, %v831
    %v834 = vrot.slane %v668, 7
    %v835 = vsel %vm754, %v834, %v666
    %v836 = vrot.slane %v670, 6
    %v837 = vsel %vm757, %v836, %v835
    %v838 = vrot.slane %v672, 5
    %v839 = vsel %vm760, %v838, %v837
    %v840 = vrot.slane %v700, 7
    %v841 = vsel %vm754, %v840, %v698
    %v842 = vrot.slane %v702, 6
    %v843 = vsel %vm757, %v842, %v841
    %v844 = vrot.slane %v704, 5
    %v845 = vsel %vm760, %v844, %v843
    %v846 = vrot.slane %v732, 7
    %v847 = vsel %vm754, %v846, %v730
    %v848 = vrot.slane %v734, 6
    %v849 = vsel %vm757, %v848, %v847
    %v850 = vrot.slane %v736, 5
    %v851 = vsel %vm760, %v850, %v849
    %v852 = vrot.slane %v494, 7
    %v853 = vsel %vm754, %v852, %v491
    %v854 = vrot.slane %v497, 6
    %v855 = vsel %vm757, %v854, %v853
    %v856 = vrot.slane %v500, 5
    %v857 = vsel %vm760, %v856, %v855
    %v858 = vrot.slane %v548, 7
    %v859 = vsel %vm754, %v858, %v546
    %v860 = vrot.slane %v550, 6
    %v861 = vsel %vm757, %v860, %v859
    %v862 = vrot.slane %v552, 5
    %v863 = vsel %vm760, %v862, %v861
    %v864 = vrot.slane %v580, 7
    %v865 = vsel %vm754, %v864, %v578
    %v866 = vrot.slane %v582, 6
    %v867 = vsel %vm757, %v866, %v865
    %v868 = vrot.slane %v584, 5
    %v869 = vsel %vm760, %v868, %v867
    %v870 = vrot.slane %v612, 7
    %v871 = vsel %vm754, %v870, %v610
    %v872 = vrot.slane %v614, 6
    %v873 = vsel %vm757, %v872, %v871
    %v874 = vrot.slane %v616, 5
    %v875 = vsel %vm760, %v874, %v873
    %v876 = vrot.slane %v644, 7
    %v877 = vsel %vm754, %v876, %v642
    %v878 = vrot.slane %v646, 6
    %v879 = vsel %vm757, %v878, %v877
    %v880 = vrot.slane %v648, 5
    %v881 = vsel %vm760, %v880, %v879
    %v882 = vrot.slane %v676, 7
    %v883 = vsel %vm754, %v882, %v674
    %v884 = vrot.slane %v678, 6
    %v885 = vsel %vm757, %v884, %v883
    %v886 = vrot.slane %v680, 5
    %v887 = vsel %vm760, %v886, %v885
    %v888 = vrot.slane %v708, 7
    %v889 = vsel %vm754, %v888, %v706
    %v890 = vrot.slane %v710, 6
    %v891 = vsel %vm757, %v890, %v889
    %v892 = vrot.slane %v712, 5
    %v893 = vsel %vm760, %v892, %v891
    %v894 = vrot.slane %v740, 7
    %v895 = vsel %vm754, %v894, %v738
    %v896 = vrot.slane %v742, 6
    %v897 = vsel %vm757, %v896, %v895
    %v898 = vrot.slane %v744, 5
    %v899 = vsel %vm760, %v898, %v897
    %v900 = vrot.slane %v506, 7
    %v901 = vsel %vm754, %v900, %v503
    %v902 = vrot.slane %v509, 6
    %v903 = vsel %vm757, %v902, %v901
    %v904 = vrot.slane %v512, 5
    %v905 = vsel %vm760, %v904, %v903
    %v906 = vrot.slane %v556, 7
    %v907 = vsel %vm754, %v906, %v554
    %v908 = vrot.slane %v558, 6
    %v909 = vsel %vm757, %v908, %v907
    %v910 = vrot.slane %v560, 5
    %v911 = vsel %vm760, %v910, %v909
    %v912 = vrot.slane %v588, 7
    %v913 = vsel %vm754, %v912, %v586
    %v914 = vrot.slane %v590, 6
    %v915 = vsel %vm757, %v914, %v913
    %v916 = vrot.slane %v592, 5
    %v917 = vsel %vm760, %v916, %v915
    %v918 = vrot.slane %v620, 7
    %v919 = vsel %vm754, %v918, %v618
    %v920 = vrot.slane %v622, 6
    %v921 = vsel %vm757, %v920, %v919
    %v922 = vrot.slane %v624, 5
    %v923 = vsel %vm760, %v922, %v921
    %v924 = vrot.slane %v652, 7
    %v925 = vsel %vm754, %v924, %v650
    %v926 = vrot.slane %v654, 6
    %v927 = vsel %vm757, %v926, %v925
    %v928 = vrot.slane %v656, 5
    %v929 = vsel %vm760, %v928, %v927
    %v930 = vrot.slane %v684, 7
    %v931 = vsel %vm754, %v930, %v682
    %v932 = vrot.slane %v686, 6
    %v933 = vsel %vm757, %v932, %v931
    %v934 = vrot.slane %v688, 5
    %v935 = vsel %vm760, %v934, %v933
    %v936 = vrot.slane %v716, 7
    %v937 = vsel %vm754, %v936, %v714
    %v938 = vrot.slane %v718, 6
    %v939 = vsel %vm757, %v938, %v937
    %v940 = vrot.slane %v720, 5
    %v941 = vsel %vm760, %v940, %v939
    %v942 = vrot.slane %v748, 7
    %v943 = vsel %vm754, %v942, %v746
    %v944 = vrot.slane %v750, 6
    %v945 = vsel %vm757, %v944, %v943
    %v946 = vrot.slane %v752, 5
    %v947 = vsel %vm760, %v946, %v945
    %v980 = vcombine.low %v761, %v773
    %v982 = vunpack.c.l.s4 1983009808
    %v983 = vunpack.c.0.s8 %v982
    %v984 = vlaneseq
    %v985 = vshrl.u32 %v984, 7
    %v986 = vsub.s32 %v983, %v985
    %v987 = vrot.slane %v980, %v986
    %v988 = vcombine.low %v767, %v779
    %v990 = vunpack.c.l.s4 1983009808
    %v991 = vunpack.c.0.s8 %v990
    %v992 = vlaneseq
    %v993 = vshrl.u32 %v992, 7
    %v994 = vsub.s32 %v991, %v993
    %v995 = vrot.slane %v988, %v994
    %v996 = vcombine.low %v785, %v797
    %v998 = vunpack.c.l.s4 1983009808
    %v999 = vunpack.c.0.s8 %v998
    %v1000 = vlaneseq
    %v1001 = vshrl.u32 %v1000, 7
    %v1002 = vsub.s32 %v999, %v1001
    %v1003 = vrot.slane %v996, %v1002
    %v1004 = vcombine.low %v791, %v803
    %v1006 = vunpack.c.l.s4 1983009808
    %v1007 = vunpack.c.0.s8 %v1006
    %v1008 = vlaneseq
    %v1009 = vshrl.u32 %v1008, 7
    %v1010 = vsub.s32 %v1007, %v1009
    %v1011 = vrot.slane %v1004, %v1010
    %v1012 = vcombine.low %v987, %v995
    %v1013 = vcombine.high %v987, %v995
    %v1015 = vunpack.c.l.s4 1934713408
    %v1016 = vunpack.c.0.s8 %v1015
    %v1017 = vlaneseq
    %v1018 = vshrl.u32 %v1017, 7
    %v1019 = vsub.s32 %v1016, %v1018
    %v1020 = vrot.slane %v1012, %v1019
    %v1022 = vunpack.c.l.s4 1934713408
    %v1023 = vunpack.c.0.s8 %v1022
    %v1024 = vlaneseq
    %v1025 = vshrl.u32 %v1024, 7
    %v1026 = vsub.s32 %v1023, %v1025
    %v1027 = vrot.slane %v1013, %v1026
    %v1028 = vcombine.low %v1003, %v1011
    %v1029 = vcombine.high %v1003, %v1011
    %v1031 = vunpack.c.l.s4 1934713408
    %v1032 = vunpack.c.0.s8 %v1031
    %v1033 = vlaneseq
    %v1034 = vshrl.u32 %v1033, 7
    %v1035 = vsub.s32 %v1032, %v1034
    %v1036 = vrot.slane %v1028, %v1035
    %v1038 = vunpack.c.l.s4 1934713408
    %v1039 = vunpack.c.0.s8 %v1038
    %v1040 = vlaneseq
    %v1041 = vshrl.u32 %v1040, 7
    %v1042 = vsub.s32 %v1039, %v1041
    %v1043 = vrot.slane %v1029, %v1042
    %v1044 = vcombine.low %v1020, %v1036
    %v1045 = vcombine.high %v1020, %v1036
    %v1046 = vcombine.low %v1027, %v1043
    %v1047 = vcombine.high %v1027, %v1043
    %v1048 = vcombine.low %v809, %v821
    %v1050 = vunpack.c.l.s4 1983009808
    %v1051 = vunpack.c.0.s8 %v1050
    %v1052 = vlaneseq
    %v1053 = vshrl.u32 %v1052, 7
    %v1054 = vsub.s32 %v1051, %v1053
    %v1055 = vrot.slane %v1048, %v1054
    %v1056 = vcombine.low %v815, %v827
    %v1058 = vunpack.c.l.s4 1983009808
    %v1059 = vunpack.c.0.s8 %v1058
    %v1060 = vlaneseq
    %v1061 = vshrl.u32 %v1060, 7
    %v1062 = vsub.s32 %v1059, %v1061
    %v1063 = vrot.slane %v1056, %v1062
    %v1064 = vcombine.low %v833, %v845
    %v1066 = vunpack.c.l.s4 1983009808
    %v1067 = vunpack.c.0.s8 %v1066
    %v1068 = vlaneseq
    %v1069 = vshrl.u32 %v1068, 7
    %v1070 = vsub.s32 %v1067, %v1069
    %v1071 = vrot.slane %v1064, %v1070
    %v1072 = vcombine.low %v839, %v851
    %v1074 = vunpack.c.l.s4 1983009808
    %v1075 = vunpack.c.0.s8 %v1074
    %v1076 = vlaneseq
    %v1077 = vshrl.u32 %v1076, 7
    %v1078 = vsub.s32 %v1075, %v1077
    %v1079 = vrot.slane %v1072, %v1078
    %v1080 = vcombine.low %v1055, %v1063
    %v1081 = vcombine.high %v1055, %v1063
    %v1083 = vunpack.c.l.s4 1934713408
    %v1084 = vunpack.c.0.s8 %v1083
    %v1085 = vlaneseq
    %v1086 = vshrl.u32 %v1085, 7
    %v1087 = vsub.s32 %v1084, %v1086
    %v1088 = vrot.slane %v1080, %v1087
    %v1090 = vunpack.c.l.s4 1934713408
    %v1091 = vunpack.c.0.s8 %v1090
    %v1092 = vlaneseq
    %v1093 = vshrl.u32 %v1092, 7
    %v1094 = vsub.s32 %v1091, %v1093
    %v1095 = vrot.slane %v1081, %v1094
    %v1096 = vcombine.low %v1071, %v1079
    %v1097 = vcombine.high %v1071, %v1079
    %v1099 = vunpack.c.l.s4 1934713408
    %v1100 = vunpack.c.0.s8 %v1099
    %v1101 = vlaneseq
    %v1102 = vshrl.u32 %v1101, 7
    %v1103 = vsub.s32 %v1100, %v1102
    %v1104 = vrot.slane %v1096, %v1103
    %v1106 = vunpack.c.l.s4 1934713408
    %v1107 = vunpack.c.0.s8 %v1106
    %v1108 = vlaneseq
    %v1109 = vshrl.u32 %v1108, 7
    %v1110 = vsub.s32 %v1107, %v1109
    %v1111 = vrot.slane %v1097, %v1110
    %v1112 = vcombine.low %v1088, %v1104
    %v1113 = vcombine.high %v1088, %v1104
    %v1114 = vcombine.low %v1095, %v1111
    %v1115 = vcombine.high %v1095, %v1111
    %v1116 = vcombine.low %v857, %v869
    %v1118 = vunpack.c.l.s4 1983009808
    %v1119 = vunpack.c.0.s8 %v1118
    %v1120 = vlaneseq
    %v1121 = vshrl.u32 %v1120, 7
    %v1122 = vsub.s32 %v1119, %v1121
    %v1123 = vrot.slane %v1116, %v1122
    %v1124 = vcombine.low %v863, %v875
    %v1126 = vunpack.c.l.s4 1983009808
    %v1127 = vunpack.c.0.s8 %v1126
    %v1128 = vlaneseq
    %v1129 = vshrl.u32 %v1128, 7
    %v1130 = vsub.s32 %v1127, %v1129
    %v1131 = vrot.slane %v1124, %v1130
    %v1132 = vcombine.low %v881, %v893
    %v1134 = vunpack.c.l.s4 1983009808
    %v1135 = vunpack.c.0.s8 %v1134
    %v1136 = vlaneseq
    %v1137 = vshrl.u32 %v1136, 7
    %v1138 = vsub.s32 %v1135, %v1137
    %v1139 = vrot.slane %v1132, %v1138
    %v1140 = vcombine.low %v887, %v899
    %v1142 = vunpack.c.l.s4 1983009808
    %v1143 = vunpack.c.0.s8 %v1142
    %v1144 = vlaneseq
    %v1145 = vshrl.u32 %v1144, 7
    %v1146 = vsub.s32 %v1143, %v1145
    %v1147 = vrot.slane %v1140, %v1146
    %v1148 = vcombine.low %v1123, %v1131
    %v1149 = vcombine.high %v1123, %v1131
    %v1151 = vunpack.c.l.s4 1934713408
    %v1152 = vunpack.c.0.s8 %v1151
    %v1153 = vlaneseq
    %v1154 = vshrl.u32 %v1153, 7
    %v1155 = vsub.s32 %v1152, %v1154
    %v1156 = vrot.slane %v1148, %v1155
    %v1158 = vunpack.c.l.s4 1934713408
    %v1159 = vunpack.c.0.s8 %v1158
    %v1160 = vlaneseq
    %v1161 = vshrl.u32 %v1160, 7
    %v1162 = vsub.s32 %v1159, %v1161
    %v1163 = vrot.slane %v1149, %v1162
    %v1164 = vcombine.low %v1139, %v1147
    %v1165 = vcombine.high %v1139, %v1147
    %v1167 = vunpack.c.l.s4 1934713408
    %v1168 = vunpack.c.0.s8 %v1167
    %v1169 = vlaneseq
    %v1170 = vshrl.u32 %v1169, 7
    %v1171 = vsub.s32 %v1168, %v1170
    %v1172 = vrot.slane %v1164, %v1171
    %v1174 = vunpack.c.l.s4 1934713408
    %v1175 = vunpack.c.0.s8 %v1174
    %v1176 = vlaneseq
    %v1177 = vshrl.u32 %v1176, 7
    %v1178 = vsub.s32 %v1175, %v1177
    %v1179 = vrot.slane %v1165, %v1178
    %v1180 = vcombine.low %v1156, %v1172
    %v1181 = vcombine.high %v1156, %v1172
    %v1182 = vcombine.low %v1163, %v1179
    %v1183 = vcombine.high %v1163, %v1179
    %v1184 = vcombine.low %v905, %v917
    %v1186 = vunpack.c.l.s4 1983009808
    %v1187 = vunpack.c.0.s8 %v1186
    %v1188 = vlaneseq
    %v1189 = vshrl.u32 %v1188, 7
    %v1190 = vsub.s32 %v1187, %v1189
    %v1191 = vrot.slane %v1184, %v1190
    %v1192 = vcombine.low %v911, %v923
    %v1194 = vunpack.c.l.s4 1983009808
    %v1195 = vunpack.c.0.s8 %v1194
    %v1196 = vlaneseq
    %v1197 = vshrl.u32 %v1196, 7
    %v1198 = vsub.s32 %v1195, %v1197
    %v1199 = vrot.slane %v1192, %v1198
    %v1200 = vcombine.low %v929, %v941
    %v1202 = vunpack.c.l.s4 1983009808
    %v1203 = vunpack.c.0.s8 %v1202
    %v1204 = vlaneseq
    %v1205 = vshrl.u32 %v1204, 7
    %v1206 = vsub.s32 %v1203, %v1205
    %v1207 = vrot.slane %v1200, %v1206
    %v1208 = vcombine.low %v935, %v947
    %v1210 = vunpack.c.l.s4 1983009808
    %v1211 = vunpack.c.0.s8 %v1210
    %v1212 = vlaneseq
    %v1213 = vshrl.u32 %v1212, 7
    %v1214 = vsub.s32 %v1211, %v1213
    %v1215 = vrot.slane %v1208, %v1214
    %v1216 = vcombine.low %v1191, %v1199
    %v1217 = vcombine.high %v1191, %v1199
    %v1219 = vunpack.c.l.s4 1934713408
    %v1220 = vunpack.c.0.s8 %v1219
    %v1221 = vlaneseq
    %v1222 = vshrl.u32 %v1221, 7
    %v1223 = vsub.s32 %v1220, %v1222
    %v1224 = vrot.slane %v1216, %v1223
    %v1226 = vunpack.c.l.s4 1934713408
    %v1227 = vunpack.c.0.s8 %v1226
    %v1228 = vlaneseq
    %v1229 = vshrl.u32 %v1228, 7
    %v1230 = vsub.s32 %v1227, %v1229
    %v1231 = vrot.slane %v1217, %v1230
    %v1232 = vcombine.low %v1207, %v1215
    %v1233 = vcombine.high %v1207, %v1215
    %v1235 = vunpack.c.l.s4 1934713408
    %v1236 = vunpack.c.0.s8 %v1235
    %v1237 = vlaneseq
    %v1238 = vshrl.u32 %v1237, 7
    %v1239 = vsub.s32 %v1236, %v1238
    %v1240 = vrot.slane %v1232, %v1239
    %v1242 = vunpack.c.l.s4 1934713408
    %v1243 = vunpack.c.0.s8 %v1242
    %v1244 = vlaneseq
    %v1245 = vshrl.u32 %v1244, 7
    %v1246 = vsub.s32 %v1243, %v1245
    %v1247 = vrot.slane %v1233, %v1246
    %v1248 = vcombine.low %v1224, %v1240
    %v1249 = vcombine.high %v1224, %v1240
    %v1250 = vcombine.low %v1231, %v1247
    %v1251 = vcombine.high %v1231, %v1247
    %vm1252 = vcmask 15360
    %v1253 = vsel %vm1252, %v1044, -inf
    %1254 = vmax.xlane.f32.xlu0 %v1253
    %v1255 = vpop.xlane.xlu0 %1254
    %v1256 = vsel %vm1252, %v1045, -inf
    %1257 = vmax.xlane.f32.xlu0 %v1256
    %v1258 = vpop.xlane.xlu0 %1257
    %v1259 = vsel %vm1252, %v1046, -inf
    %1260 = vmax.xlane.f32.xlu0 %v1259
    %v1261 = vpop.xlane.xlu0 %1260
    %v1262 = vsel %vm1252, %v1047, -inf
    %1263 = vmax.xlane.f32.xlu0 %v1262
    %v1264 = vpop.xlane.xlu0 %1263
    %v1265 = vsel %vm1252, %v1112, -inf
    %1266 = vmax.xlane.f32.xlu0 %v1265
    %v1267 = vpop.xlane.xlu0 %1266
    %v1268 = vsel %vm1252, %v1113, -inf
    %1269 = vmax.xlane.f32.xlu0 %v1268
    %v1270 = vpop.xlane.xlu0 %1269
    %v1271 = vsel %vm1252, %v1114, -inf
    %1272 = vmax.xlane.f32.xlu0 %v1271
    %v1273 = vpop.xlane.xlu0 %1272
    %v1274 = vsel %vm1252, %v1115, -inf
    %1275 = vmax.xlane.f32.xlu0 %v1274
    %v1276 = vpop.xlane.xlu0 %1275
    %v1277 = vsel %vm1252, %v1180, -inf
    %1278 = vmax.xlane.f32.xlu0 %v1277
    %v1279 = vpop.xlane.xlu0 %1278
    %v1280 = vsel %vm1252, %v1181, -inf
    %1281 = vmax.xlane.f32.xlu0 %v1280
    %v1282 = vpop.xlane.xlu0 %1281
    %v1283 = vsel %vm1252, %v1182, -inf
    %1284 = vmax.xlane.f32.xlu0 %v1283
    %v1285 = vpop.xlane.xlu0 %1284
    %v1286 = vsel %vm1252, %v1183, -inf
    %1287 = vmax.xlane.f32.xlu0 %v1286
    %v1288 = vpop.xlane.xlu0 %1287
    %v1289 = vsel %vm1252, %v1248, -inf
    %1290 = vmax.xlane.f32.xlu0 %v1289
    %v1291 = vpop.xlane.xlu0 %1290
    %v1292 = vsel %vm1252, %v1249, -inf
    %1293 = vmax.xlane.f32.xlu0 %v1292
    %v1294 = vpop.xlane.xlu0 %1293
    %v1295 = vsel %vm1252, %v1250, -inf
    %1296 = vmax.xlane.f32.xlu0 %v1295
    %v1297 = vpop.xlane.xlu0 %1296
    %v1298 = vsel %vm1252, %v1251, -inf
    %1299 = vmax.xlane.f32.xlu0 %v1298
    %v1300 = vpop.xlane.xlu0 %1299
    %v1317 = vlaneseq
    %v1318 = vand.u32 %v1317, 127
    %v1319 = vlaneseq
    %v1320 = vshrl.u32 %v1319, 7
    %v1321 = vsub.s32 %v1318, %v1320
    %v1322 = vrot.slane %v1255, %v1321
    %v1323 = vlaneseq
    %v1324 = vshrl.u32 %v1323, 7
    %v1325 = vsub.s32 %v1318, %v1324
    %v1326 = vrot.slane %v1258, %v1325
    %v1327 = vlaneseq
    %v1328 = vshrl.u32 %v1327, 7
    %v1329 = vsub.s32 %v1318, %v1328
    %v1330 = vrot.slane %v1261, %v1329
    %v1331 = vlaneseq
    %v1332 = vshrl.u32 %v1331, 7
    %v1333 = vsub.s32 %v1318, %v1332
    %v1334 = vrot.slane %v1264, %v1333
    %v1335 = vlaneseq
    %v1336 = vshrl.u32 %v1335, 7
    %v1337 = vsub.s32 %v1318, %v1336
    %v1338 = vrot.slane %v1267, %v1337
    %v1339 = vlaneseq
    %v1340 = vshrl.u32 %v1339, 7
    %v1341 = vsub.s32 %v1318, %v1340
    %v1342 = vrot.slane %v1270, %v1341
    %v1343 = vlaneseq
    %v1344 = vshrl.u32 %v1343, 7
    %v1345 = vsub.s32 %v1318, %v1344
    %v1346 = vrot.slane %v1273, %v1345
    %v1347 = vlaneseq
    %v1348 = vshrl.u32 %v1347, 7
    %v1349 = vsub.s32 %v1318, %v1348
    %v1350 = vrot.slane %v1276, %v1349
    %v1351 = vlaneseq
    %v1352 = vshrl.u32 %v1351, 7
    %v1353 = vsub.s32 %v1318, %v1352
    %v1354 = vrot.slane %v1279, %v1353
    %v1355 = vlaneseq
    %v1356 = vshrl.u32 %v1355, 7
    %v1357 = vsub.s32 %v1318, %v1356
    %v1358 = vrot.slane %v1282, %v1357
    %v1359 = vlaneseq
    %v1360 = vshrl.u32 %v1359, 7
    %v1361 = vsub.s32 %v1318, %v1360
    %v1362 = vrot.slane %v1285, %v1361
    %v1363 = vlaneseq
    %v1364 = vshrl.u32 %v1363, 7
    %v1365 = vsub.s32 %v1318, %v1364
    %v1366 = vrot.slane %v1288, %v1365
    %v1367 = vlaneseq
    %v1368 = vshrl.u32 %v1367, 7
    %v1369 = vsub.s32 %v1318, %v1368
    %v1370 = vrot.slane %v1291, %v1369
    %v1371 = vlaneseq
    %v1372 = vshrl.u32 %v1371, 7
    %v1373 = vsub.s32 %v1318, %v1372
    %v1374 = vrot.slane %v1294, %v1373
    %v1375 = vlaneseq
    %v1376 = vshrl.u32 %v1375, 7
    %v1377 = vsub.s32 %v1318, %v1376
    %v1378 = vrot.slane %v1297, %v1377
    %v1379 = vlaneseq
    %v1380 = vshrl.u32 %v1379, 7
    %v1381 = vsub.s32 %v1318, %v1380
    %v1382 = vrot.slane %v1300, %v1381
    %v1383 = vsel %vm754, %v1326, %v1322
    %v1384 = vsel %vm757, %v1330, %v1383
    %v1385 = vsel %vm760, %v1334, %v1384
    %v1386 = vsel %vm754, %v1342, %v1338
    %v1387 = vsel %vm757, %v1346, %v1386
    %v1388 = vsel %vm760, %v1350, %v1387
    %v1389 = vsel %vm754, %v1358, %v1354
    %v1390 = vsel %vm757, %v1362, %v1389
    %v1391 = vsel %vm760, %v1366, %v1390
    %v1392 = vsel %vm754, %v1374, %v1370
    %v1393 = vsel %vm757, %v1378, %v1392
    %v1394 = vsel %vm760, %v1382, %v1393
    %vm1399 = vcmask 60416
    %1400 = vst.msk [vmem:[#allocation5] sm:$0xf] %vm1399, %v1385
    %1401 = vst.msk [vmem:[#allocation5 + $0x4] sm:$0xf] %vm1399, %v1388
    %1402 = vst.msk [vmem:[#allocation5 + $0x8] sm:$0xf] %vm1399, %v1391
    %1403 = vst.msk [vmem:[#allocation5 + $0xc] sm:$0xf] %vm1399, %v1394
    // Predicated region
    $region10: #{tpu_custom_call.1} parent=1 // pred_check
      _
    $region11: #{tpu_custom_call.1} parent=1 // pred_check_branch
      %1405 = sbr.rel (0) target = $region13
    $region12: #{tpu_custom_call.1} parent=1 // pred_region
      %s1407 = ssub.s32 256, 256
      %1408 = vsyncadd [#allocation4], %s1407
      %s1409 = sshll.u32 [#allocation5], 4
      %s1410 = int_to_ptr.vmem [resolvable:$true] %s1409
      %1415 = dma.vmem_to_hbm [thread:$0]  %s1410, 256, %s1, [#allocation4], 64, 64, 4
    $region13: #{tpu_custom_call.1} parent=1 // pred_fallthru
      _
    // Predicated region
    $region14: #{tpu_custom_call.1} parent=1 // pred_check
      _
    $region15: #{tpu_custom_call.1} parent=1 // pred_check_branch
      %1417 = sbr.rel (0) target = $region17
    $region16: #{tpu_custom_call.1} parent=1 // pred_region
      %1418 = dma.done [#allocation4], 256
    $region17: #{tpu_custom_call.1} parent=1 // pred_fallthru
      _
    %1419 = vsyncpa [#allocation3], 1
    %1420 = vsyncpa [#allocation4], 1

</llo_original>
